<compile_context>
chip_gen: v6e
topology: v6e:2x2x1
jax: 0.10.0
libtpu: 0.0.40
codegen_flags: <defaults>
</compile_context>

<pallas_src>
import functools
import math

import jax
import jax.numpy as jnp
from jax.experimental import pallas as pl
from jax.experimental.pallas import tpu as pltpu


# ---------------------------------------------------------------------------
# small helpers
# ---------------------------------------------------------------------------
def _pick_tile(total, cap):
    """Largest divisor of `total` <= cap, preferring sublane-aligned (x8) or
    full-extent tiles."""
    best_aligned, best_any = 0, 1
    for d in range(1, total + 1):
        if total % d or d > cap:
            continue
        best_any = max(best_any, d)
        if d % 8 == 0 or d == total:
            best_aligned = max(best_aligned, d)
    return best_aligned if best_aligned else best_any


def _padded_bytes(shape, itemsize=4):
    """VMEM footprint of an array with (8, 128) trailing-tile padding."""
    if not shape:
        return itemsize
    s = list(shape)
    s[-1] = -(-s[-1] // 128) * 128
    if len(s) >= 2:
        s[-2] = -(-s[-2] // 8) * 8
    return int(math.prod(s)) * itemsize


# ---------------------------------------------------------------------------
# Kernel A: featurize a block of UT units per grid step.
#   F[u] = S_t[u] @ Wf[u] + bf[u]   (S_t laid out (unit_no, B, t) so each block
#   is one contiguous DMA).   grid = (unit_no // UT,)
# ---------------------------------------------------------------------------
def _featurize_kernel(s_ref, w_ref, b_ref, f_ref, *, matmul_dtype):
    # s_ref: (UT, B, t)   w_ref: (UT, t, f)   b_ref: (UT, f)   f_ref: (UT, B, f)
    s = s_ref[...].astype(matmul_dtype)
    w = w_ref[...].astype(matmul_dtype)
    f_ref[...] = (
        jnp.einsum("ubt,utf->ubf", s, w, preferred_element_type=jnp.float32)
        + b_ref[...][:, None, :]
    )


def featurize(s_t, w_feat, b_feat, *, units_per_step, matmul_dtype=jnp.float32):
    unit_no, B, t_dim = s_t.shape
    f_dim = w_feat.shape[-1]
    UT = units_per_step
    assert unit_no % UT == 0, (unit_no, UT)

    flops = 2 * unit_no * B * t_dim * f_dim
    bytes_accessed = 4 * (s_t.size + w_feat.size + b_feat.size
                          + unit_no * B * f_dim)

    kernel = functools.partial(_featurize_kernel, matmul_dtype=matmul_dtype)
    return pl.pallas_call(
        kernel,
        out_shape=jax.ShapeDtypeStruct((unit_no, B, f_dim), jnp.float32),
        grid_spec=pltpu.PrefetchScalarGridSpec(
            num_scalar_prefetch=0,
            grid=(unit_no // UT,),
            in_specs=[
                pl.BlockSpec((UT, B, t_dim), lambda n: (n, 0, 0)),
                pl.BlockSpec((UT, t_dim, f_dim), lambda n: (n, 0, 0)),
                pl.BlockSpec((UT, f_dim), lambda n: (n, 0)),
            ],
            out_specs=pl.BlockSpec((UT, B, f_dim), lambda n: (n, 0, 0)),
        ),
        compiler_params=pltpu.CompilerParams(
            dimension_semantics=("parallel",)),
        cost_estimate=pl.CostEstimate(flops=int(flops), transcendentals=0,
                                      bytes_accessed=int(bytes_accessed)),
    )(s_t, w_feat, b_feat)


# ---------------------------------------------------------------------------
# Kernel B: decode a block of TP pixels per grid step.
#   f_all lives whole-resident in VMEM; gather indices come from the SMEM
#   scalar-prefetched pix_units table; the per-pixel hidden layers are computed
#   with one batched contraction per step; output stores are (B, TP) slabs.
#   grid = (p_dim // TP,)
# ---------------------------------------------------------------------------
def _decode_kernel(pu_ref, f_ref, w1_ref, b1_ref, w2_ref, alpha_ref, b2_ref,
                   out_ref, g_ref, *, TP, k_dim, f_dim, matmul_dtype):
    pb = pl.program_id(0)

    # Gather: F[pu[x, i]] -> g_ref laid out (TP, B, k*f).  f_all is resident in
    # VMEM, so these are small VMEM->vreg->VMEM copies (no HBM DMAs).
    for p in range(TP):
        base = (pb * TP + p) * k_dim
        for i in range(k_dim):
            g_ref[p, :, i * f_dim:(i + 1) * f_dim] = f_ref[pu_ref[base + i]]

    # Hidden layer: one batched matmul over the whole pixel block.
    g = g_ref[...].astype(matmul_dtype)                       # (TP, B, k*f)
    w1 = w1_ref[...].astype(matmul_dtype)                     # (TP, k*f, h)
    h = jnp.einsum("pbc,pch->pbh", g, w1,
                   preferred_element_type=jnp.float32)        # (TP, B, h)
    h = h + b1_ref[...][:, None, :]

    # Per-pixel PReLU (alpha broadcast over batch & hidden), f32 elementwise.
    alpha = alpha_ref[...][:, :, None]                        # (TP, 1, 1)
    h = jnp.where(h > 0, h, alpha * h)

    # Output layer: reduce over hidden, add bias, store a lane-dense slab.
    o = jnp.sum(h * w2_ref[...][:, None, :], axis=-1)         # (TP, B)
    o = o + b2_ref[...]                                       # + (TP, 1)
    out_ref[...] = o.T                                        # (B, TP)


def decode(pu_flat, f_all, w1, b1, w2, alpha, b2, *, pixels_per_step,
           matmul_dtype=jnp.float32, vmem_limit_bytes=None):
    unit_no, B, f_dim = f_all.shape
    p_dim, kf, h_dim = w1.shape
    k_dim = kf // f_dim
    TP = pixels_per_step
    assert p_dim % TP == 0, (p_dim, TP)

    flops = 2 * p_dim * B * kf * h_dim + 2 * p_dim * B * h_dim
    bytes_accessed = 4 * (f_all.size + w1.size + b1.size + w2.size
                          + alpha.size + b2.size + B * p_dim + pu_flat.size)

    kernel = functools.partial(_decode_kernel, TP=TP, k_dim=k_dim, f_dim=f_dim,
                               matmul_dtype=matmul_dtype)
    cparams = dict(dimension_semantics=("parallel",))
    if vmem_limit_bytes is not None:
        cparams["vmem_limit_bytes"] = int(vmem_limit_bytes)

    return pl.pallas_call(
        kernel,
        out_shape=jax.ShapeDtypeStruct((B, p_dim), jnp.float32),
        grid_spec=pltpu.PrefetchScalarGridSpec(
            num_scalar_prefetch=1,                         # pix_units -> SMEM
            grid=(p_dim // TP,),
            in_specs=[
                # f_all: whole-resident, constant index_map -> fetched once.
                pl.BlockSpec((unit_no, B, f_dim), lambda pb, pu: (0, 0, 0)),
                pl.BlockSpec((TP, kf, h_dim), lambda pb, pu: (pb, 0, 0)),  # w1
                pl.BlockSpec((TP, h_dim), lambda pb, pu: (pb, 0)),         # b1
                pl.BlockSpec((TP, h_dim), lambda pb, pu: (pb, 0)),         # w2
                pl.BlockSpec((TP, 1), lambda pb, pu: (pb, 0)),             # alpha
                pl.BlockSpec((TP, 1), lambda pb, pu: (pb, 0)),             # b2
            ],
            out_specs=pl.BlockSpec((B, TP), lambda pb, pu: (0, pb)),
            scratch_shapes=[pltpu.VMEM((TP, B, kf), jnp.float32)],
        ),
        compiler_params=pltpu.CompilerParams(**cparams),
        cost_estimate=pl.CostEstimate(flops=int(flops), transcendentals=0,
                                      bytes_accessed=int(bytes_accessed)),
    )(pu_flat, f_all, w1, b1, w2, alpha, b2)


# ---------------------------------------------------------------------------
# Wrapper mirroring NN_Decoder.forward(S, pix_units)
# ---------------------------------------------------------------------------
def nn_decoder_forward(S, pix_units, params, *, unit_no, t_dim,
                       matmul_dtype=jnp.float32):
    B = S.shape[0]
    p_dim, k_dim = pix_units.shape
    f_dim = params["w_feat"].shape[-1]
    h_dim = params["b1"].shape[-1]

    # Tiling: largest divisor tiles; keep grid >= 2 where possible so v7x's
    # two TensorCores both get steps; bound the decode gather unroll.
    UT = _pick_tile(unit_no, unit_no if unit_no <= 8 else unit_no // 2)
    tp_cap = p_dim if p_dim <= 8 else max(p_dim // 2, 8)
    tp_cap = min(tp_cap, max(8, 128 // max(k_dim, 1)))
    TP = _pick_tile(p_dim, tp_cap)

    # v7x VMEM budget (64 MiB physical / ~32 MiB scoped default).
    resident = (_padded_bytes((unit_no, B, f_dim))                   # f_all
                + 2 * (_padded_bytes((TP, k_dim * f_dim, h_dim))     # w1 x2buf
                       + 2 * _padded_bytes((TP, h_dim))              # b1, w2
                       + 2 * _padded_bytes((TP, 1)))                 # alpha, b2
                + 2 * _padded_bytes((B, TP))                         # out
                + _padded_bytes((TP, B, k_dim * f_dim)))             # scratch
    assert resident < (48 << 20), (
        f"decode VMEM working set {resident / 2**20:.1f} MiB exceeds budget")
    # TODO(synk): for configs where f_all does not fit VMEM, tile units with an
    # inner emit_pipeline loop instead of the whole-resident f_all path.
    vmem_limit = None
    if resident > (24 << 20):
        vmem_limit = min(resident + (8 << 20), 48 << 20)

    # Featurize: transpose S ONCE to (unit_no, B, t) so per-step blocks are
    # contiguous DMAs.
    s_t = jnp.transpose(S.reshape(B, unit_no, t_dim), (1, 0, 2))
    f_all = featurize(s_t, params["w_feat"], params["b_feat"],
                      units_per_step=UT, matmul_dtype=matmul_dtype)

    # Decode: indices to SMEM via scalar prefetch; w1 reshaped so the hidden
    # layer is one batched matmul per pixel block; output is (B, p_dim).
    pu_flat = pix_units.reshape(-1).astype(jnp.int32)
    w1 = params["w1"].reshape(p_dim, k_dim * f_dim, h_dim)
    out = decode(pu_flat, f_all, w1, params["b1"], params["w2"],
                 params["alpha"].reshape(p_dim, 1),
                 params["b2"].reshape(p_dim, 1),
                 pixels_per_step=TP, matmul_dtype=matmul_dtype,
                 vmem_limit_bytes=vmem_limit)
    return out                                               # (B, p_dim)


# ---------------------------------------------------------------------------
# Pure-JAX reference (same math / same parameter layout) for validation
# ---------------------------------------------------------------------------
def nn_decoder_reference(S, pix_units, params, *, unit_no, t_dim):
    B = S.shape[0]
    p_dim, k_dim = pix_units.shape
    s3 = S.reshape(B, unit_no, t_dim)
    F_all = (jnp.einsum("but,utf->ubf", s3, params["w_feat"])
             + params["b_feat"][:, None, :])                 # (unit_no, B, f)
    outs = []
    for x in range(p_dim):
        acc = None
        for i in range(k_dim):
            c = F_all[pix_units[x, i]] @ params["w1"][x, i]
            acc = c if acc is None else acc + c
        h = acc + params["b1"][x]
        a = params["alpha"][x]
        h = jnp.where(h > 0, h, a * h)
        outs.append(h @ params["w2"][x] + params["b2"][x])
    return jnp.stack(outs, axis=1)                           # (B, p_dim)


if __name__ == "__main__":
    # Small, module-consistent shapes.
    B, unit_no, t_dim, f_dim = 8, 16, 8, 8
    k_dim, h_dim, p_dim = 2, 16, 16

    key = jax.random.PRNGKey(0)
    ks = jax.random.split(key, 8)

    params = {
        "w_feat": jax.random.normal(ks[0], (unit_no, t_dim, f_dim),
                                    jnp.float32) / jnp.sqrt(t_dim),
        "b_feat": jax.random.normal(ks[1], (unit_no, f_dim), jnp.float32) * 0.1,
        "w1": jax.random.normal(ks[2], (p_dim, k_dim, f_dim, h_dim),
                                jnp.float32) / jnp.sqrt(k_dim * f_dim),
        "b1": jax.random.normal(ks[3], (p_dim, h_dim), jnp.float32) * 0.1,
        "w2": jax.random.normal(ks[4], (p_dim, h_dim),
                                jnp.float32) / jnp.sqrt(h_dim),
        "b2": jax.random.normal(ks[5], (p_dim,), jnp.float32) * 0.1,
        "alpha": jnp.full((p_dim,), 0.25, jnp.float32),      # PReLU default
    }

    S = jax.random.normal(ks[6], (B, unit_no * t_dim), jnp.float32)
    pix_units = jax.random.randint(ks[7], (p_dim, k_dim), 0, unit_no,
                                   dtype=jnp.int32)

    out = nn_decoder_forward(S, pix_units, params,
                             unit_no=unit_no, t_dim=t_dim)
    out = jax.block_until_ready(out)

    ref = nn_decoder_reference(S, pix_units, params,
                               unit_no=unit_no, t_dim=t_dim)
    assert out.shape == (B, p_dim), out.shape
    err = float(jnp.max(jnp.abs(out - ref)))
    assert jnp.allclose(out, ref, atol=1e-3, rtol=1e-3), err
    print("KERNEL_OK")
</pallas_src>

<mosaic_0001>
module attributes {stable_mosaic.version = 11 : i64} {
  func.func @_featurize_kernel(%arg0: i32, %arg1: memref<8x8x8xf32, #tpu.memory_space<vmem>>, %arg2: memref<8x8x8xf32, #tpu.memory_space<vmem>>, %arg3: memref<8x8xf32, #tpu.memory_space<vmem>>, %arg4: memref<8x8x8xf32, #tpu.memory_space<vmem>>) attributes {dimension_semantics = [#tpu.dimension_semantics<parallel>], iteration_bounds = array<i64: 2>, scalar_prefetch = 0 : i64, scratch_operands = 0 : i64, tpu.core_type = #tpu.core_type<tc>, window_params = [{transform_indices = @transform_0, window_bounds = array<i64: 8, 8, 8>}, {transform_indices = @transform_1, window_bounds = array<i64: 8, 8, 8>}, {transform_indices = @transform_2, window_bounds = array<i64: 8, 8>}, {transform_indices = @transform_3, window_bounds = array<i64: 8, 8, 8>}]} {
    %c0 = arith.constant 0 : index
    %c0_0 = arith.constant 0 : index
    %c0_1 = arith.constant 0 : index
    %0 = vector.load %arg1[%c0, %c0_0, %c0_1] : memref<8x8x8xf32, #tpu.memory_space<vmem>>, vector<8x8x8xf32>
    %c0_2 = arith.constant 0 : index
    %c0_3 = arith.constant 0 : index
    %c0_4 = arith.constant 0 : index
    %1 = vector.load %arg2[%c0_2, %c0_3, %c0_4] : memref<8x8x8xf32, #tpu.memory_space<vmem>>, vector<8x8x8xf32>
    "tpu.trace_start"() <{level = 10 : i32, message = "ubt,utf->ubf"}> : () -> ()
    %cst = arith.constant dense<0.000000e+00> : vector<8x8x8xf32>
    %2 = tpu.matmul %0, %1, %cst {dimension_numbers = #tpu.dot_dimension_numbers<[2], [1], [1], [2], [0, 0, 0, 1, 1, 2], [0], [0]>} : vector<8x8x8xf32>, vector<8x8x8xf32>, vector<8x8x8xf32> -> vector<8x8x8xf32>
    "tpu.trace_stop"() : () -> ()
    %c0_5 = arith.constant 0 : index
    %c0_6 = arith.constant 0 : index
    %3 = vector.load %arg3[%c0_5, %c0_6] : memref<8x8xf32, #tpu.memory_space<vmem>>, vector<8x8xf32>
    %4 = vector.shape_cast %3 : vector<8x8xf32> to vector<8x1x8xf32>
    %5 = vector.broadcast %4 : vector<8x1x8xf32> to vector<8x8x8xf32>
    %6 = arith.addf %2, %5 : vector<8x8x8xf32>
    %c0_7 = arith.constant 0 : index
    %c0_8 = arith.constant 0 : index
    %c0_9 = arith.constant 0 : index
    %7 = vector.load %arg4[%c0_7, %c0_8, %c0_9] : memref<8x8x8xf32, #tpu.memory_space<vmem>>, vector<8x8x8xf32>
    tpu.vector_store %arg4[%c0_7, %c0_8, %c0_9], %6 {strides = array<i32>} : memref<8x8x8xf32, #tpu.memory_space<vmem>>, vector<8x8x8xf32>,
    return
  }
  func.func @transform_0(%arg0: i32) -> (i32, i32, i32) {
    %c0_i32 = arith.constant 0 : i32
    %c0_i32_0 = arith.constant 0 : i32
    %c0_i32_1 = arith.constant 0 : i32
    return %arg0, %c0_i32, %c0_i32_0 : i32, i32, i32
  }
  func.func @transform_1(%arg0: i32) -> (i32, i32, i32) {
    %c0_i32 = arith.constant 0 : i32
    %c0_i32_0 = arith.constant 0 : i32
    %c0_i32_1 = arith.constant 0 : i32
    return %arg0, %c0_i32, %c0_i32_0 : i32, i32, i32
  }
  func.func @transform_2(%arg0: i32) -> (i32, i32) {
    %c0_i32 = arith.constant 0 : i32
    %c0_i32_0 = arith.constant 0 : i32
    return %arg0, %c0_i32 : i32, i32
  }
  func.func @transform_3(%arg0: i32) -> (i32, i32, i32) {
    %c0_i32 = arith.constant 0 : i32
    %c0_i32_0 = arith.constant 0 : i32
    %c0_i32_1 = arith.constant 0 : i32
    return %arg0, %c0_i32, %c0_i32_0 : i32, i32, i32
  }
}

</mosaic_0001>

<llo_original>
// kernel: tpu_custom_call.1
$region0: #{tpu_custom_call.1}
  #allocation0 [shape = 'u32[]', space=smem, size = 0x4, offset = 0x4, fixed_abs, tag = 'smem constant byte address 0x4 - core index']
  #allocation1 [shape = 'u32[144,128]{1,0:T(1,128)}', space=vmem, size = 0x12000, scoped, tag = 'internal scratch']
  %s0 = inlined_call_operand.vmem [shape: f32[16,8,8], index: 0, kind: input, shape index: {}]
  %s1 = inlined_call_operand.vmem [shape: f32[16,8,8], index: 1, kind: input, shape index: {}]
  %s2 = inlined_call_operand.vmem [shape: f32[16,8], index: 2, kind: input, shape index: {}]
  %s3 = inlined_call_operand.vmem [shape: f32[16,8,8], index: 3, kind: output, shape index: {}]
  %s4 = sld [smem:[#allocation0]]
  $region45: #{tpu_custom_call.1} parent=0
    _
  %s6 = ssub.s32 1, %s4
  %s7 = scalar_select 0, %s6, %s4
  loop: start=0, step=1, limit=4
  $region2: #{tpu_custom_call.1} parent=0 // loop_pre_header
    _
  $region3: #{tpu_custom_call.1} parent=0 // loop_header
    %s9 = sphi 0, %s13
    %p10 = scmp.ge.s32.totalorder %s9, 4
    %s19 = sphi 0, %s21
    %s22 = sphi 0, %s19
    %s23 = sphi 0, %s22
    %s39 = sphi 0, %s23
    %s45 = sphi 0, %s47
    %s48 = sphi 0, %s45
    %s49 = sphi 0, %s48
    %s65 = sphi 0, %s49
    %s71 = sphi 0, %s73
    %s74 = sphi 0, %s71
    %s75 = sphi 0, %s74
    %s91 = sphi 0, %s75
    %s97 = sphi 0, %s99
    %s100 = sphi 0, %s97
    %s101 = sphi 0, %s100
    %s117 = sphi 0, %s101
  $region4: #{tpu_custom_call.1} parent=0 // loop_header_branch
    %12 = sbr.rel (%p10) target = $region8
  $region5: #{tpu_custom_call.1} parent=0 // loop_body
    %s14 = ssub.s32 %s9, 1
    %s15 = ssub.s32 %s9, 2
    %s16 = sadd.s32 %s9, 1
    %s17 = ssub.s32 %s9, %s16
    %p18 = scmp.eq.s32.totalorder %s17, 0
    %s20 = sadd.s32 %s19, 1
    %s21 = scalar_select %p18, %s19, %s20
    %p24 = pneg %p18
    %p25 = scmp.eq.s32.totalorder %s9, 1
    %p26 = por %p24, %p25
    %p27 = scmp.ne.s32.totalorder %s19, %s22
    %p28 = scmp.eq.s32.totalorder %s9, 0
    %p29 = por %p27, %p28
    %p30 = scmp.ne.s32.totalorder %s19, %s22
    %p31 = scmp.eq.s32.totalorder %s14, 1
    %p32 = por %p30, %p31
    %p33 = scmp.ne.s32.totalorder %s22, %s23
    %p34 = scmp.eq.s32.totalorder %s14, 0
    %p35 = por %p33, %p34
    %p36 = scmp.ne.s32.totalorder %s22, %s23
    %p37 = scmp.eq.s32.totalorder %s15, 1
    %p38 = por %p36, %p37
    %p40 = scmp.ne.s32.totalorder %s23, %s39
    %p41 = scmp.eq.s32.totalorder %s15, 0
    %p42 = por %p40, %p41
    %s43 = ssub.s32 %s9, %s16
    %p44 = scmp.eq.s32.totalorder %s43, 0
    %s46 = sadd.s32 %s45, 1
    %s47 = scalar_select %p44, %s45, %s46
    %p50 = pneg %p44
    %p51 = scmp.eq.s32.totalorder %s9, 1
    %p52 = por %p50, %p51
    %p53 = scmp.ne.s32.totalorder %s45, %s48
    %p54 = scmp.eq.s32.totalorder %s9, 0
    %p55 = por %p53, %p54
    %p56 = scmp.ne.s32.totalorder %s45, %s48
    %p57 = scmp.eq.s32.totalorder %s14, 1
    %p58 = por %p56, %p57
    %p59 = scmp.ne.s32.totalorder %s48, %s49
    %p60 = scmp.eq.s32.totalorder %s14, 0
    %p61 = por %p59, %p60
    %p62 = scmp.ne.s32.totalorder %s48, %s49
    %p63 = scmp.eq.s32.totalorder %s15, 1
    %p64 = por %p62, %p63
    %p66 = scmp.ne.s32.totalorder %s49, %s65
    %p67 = scmp.eq.s32.totalorder %s15, 0
    %p68 = por %p66, %p67
    %s69 = ssub.s32 %s9, %s16
    %p70 = scmp.eq.s32.totalorder %s69, 0
    %s72 = sadd.s32 %s71, 1
    %s73 = scalar_select %p70, %s71, %s72
    %p76 = pneg %p70
    %p77 = scmp.eq.s32.totalorder %s9, 1
    %p78 = por %p76, %p77
    %p79 = scmp.ne.s32.totalorder %s71, %s74
    %p80 = scmp.eq.s32.totalorder %s9, 0
    %p81 = por %p79, %p80
    %p82 = scmp.ne.s32.totalorder %s71, %s74
    %p83 = scmp.eq.s32.totalorder %s14, 1
    %p84 = por %p82, %p83
    %p85 = scmp.ne.s32.totalorder %s74, %s75
    %p86 = scmp.eq.s32.totalorder %s14, 0
    %p87 = por %p85, %p86
    %p88 = scmp.ne.s32.totalorder %s74, %s75
    %p89 = scmp.eq.s32.totalorder %s15, 1
    %p90 = por %p88, %p89
    %p92 = scmp.ne.s32.totalorder %s75, %s91
    %p93 = scmp.eq.s32.totalorder %s15, 0
    %p94 = por %p92, %p93
    %s95 = ssub.s32 %s9, %s16
    %p96 = scmp.eq.s32.totalorder %s95, 0
    %s98 = sadd.s32 %s97, 1
    %s99 = scalar_select %p96, %s97, %s98
    %p102 = pneg %p96
    %p103 = scmp.eq.s32.totalorder %s9, 1
    %p104 = por %p102, %p103
    %p105 = scmp.ne.s32.totalorder %s97, %s100
    %p106 = scmp.eq.s32.totalorder %s9, 0
    %p107 = por %p105, %p106
    %p108 = scmp.ne.s32.totalorder %s97, %s100
    %p109 = scmp.eq.s32.totalorder %s14, 1
    %p110 = por %p108, %p109
    %p111 = scmp.ne.s32.totalorder %s100, %s101
    %p112 = scmp.eq.s32.totalorder %s14, 0
    %p113 = por %p111, %p112
    %p114 = scmp.ne.s32.totalorder %s100, %s101
    %p115 = scmp.eq.s32.totalorder %s15, 1
    %p116 = por %p114, %p115
    %p118 = scmp.ne.s32.totalorder %s101, %s117
    %p119 = scmp.eq.s32.totalorder %s15, 0
    %p120 = por %p118, %p119
    %p121 = scmp.le.s32.totalorder 1, %s9
    %p122 = scmp.lt.s32.totalorder %s9, 3
    %p123 = pnand %p121, %p122
    %p124 = pneg %p123
    // Predicated region
    $region9: #{tpu_custom_call.1} parent=5 // pred_check
      _
    $region10: #{tpu_custom_call.1} parent=5 // pred_check_branch
      %126 = sbr.rel (%p123) target = $region12
    $region11: #{tpu_custom_call.1} parent=5 // pred_region
      %s127 = ssub.s32 %s9, 1
    $region12: #{tpu_custom_call.1} parent=5 // pred_fallthru
      _
    %p128 = scmp.lt.s32.totalorder %s9, 2
    // Predicated region
    $region13: #{tpu_custom_call.1} parent=5 // pred_check
      %p129 = pneg %p128
    $region14: #{tpu_custom_call.1} parent=5 // pred_check_branch
      %131 = sbr.rel (%p129) target = $region16
    $region15: #{tpu_custom_call.1} parent=5 // pred_region
      // Predicated region
      $region17: #{tpu_custom_call.1} parent=15 // pred_check
        %p132 = pneg %p29
      $region18: #{tpu_custom_call.1} parent=15 // pred_check_branch
        %134 = sbr.rel (%p132) target = $region20
      $region19: #{tpu_custom_call.1} parent=15 // pred_region
        %s135 = smul.u32 8, %s9
        %p136 = scmp.lt.s32.totalorder %s135, 15
        %s137 = scalar_select %p136, %s135, 15
        %s138 = smul.addr %s137, 8
        %s139 = scalar_lea.vmem %s0, %s138
        %s140 = smul.u32 8, %s9
      $region20: #{tpu_custom_call.1} parent=15 // pred_fallthru
        _
      // Predicated region
      $region21: #{tpu_custom_call.1} parent=15 // pred_check
        %p141 = pneg %p55
      $region22: #{tpu_custom_call.1} parent=15 // pred_check_branch
        %143 = sbr.rel (%p141) target = $region24
      $region23: #{tpu_custom_call.1} parent=15 // pred_region
        %s144 = smul.u32 8, %s9
        %p145 = scmp.lt.s32.totalorder %s144, 15
        %s146 = scalar_select %p145, %s144, 15
        %s147 = smul.addr %s146, 8
        %s148 = scalar_lea.vmem %s1, %s147
        %s149 = smul.u32 8, %s9
      $region24: #{tpu_custom_call.1} parent=15 // pred_fallthru
        _
      // Predicated region
      $region25: #{tpu_custom_call.1} parent=15 // pred_check
        %p150 = pneg %p81
      $region26: #{tpu_custom_call.1} parent=15 // pred_check_branch
        %152 = sbr.rel (%p150) target = $region28
      $region27: #{tpu_custom_call.1} parent=15 // pred_region
        %p153 = scmp.lt.s32.totalorder %s9, 1
        %s154 = scalar_select %p153, %s9, 1
        %s155 = smul.addr %s154, 8
        %s156 = scalar_lea.vmem %s2, %s155
      $region28: #{tpu_custom_call.1} parent=15 // pred_fallthru
        _
    $region16: #{tpu_custom_call.1} parent=5 // pred_fallthru
      _
    %p157 = scmp.le.s32.totalorder 1, %s9
    %p158 = scmp.lt.s32.totalorder %s9, 3
    %p159 = pnand %p157, %p158
    %p160 = pneg %p159
    // Predicated region
    $region29: #{tpu_custom_call.1} parent=5 // pred_check
      _
    $region30: #{tpu_custom_call.1} parent=5 // pred_check_branch
      %162 = sbr.rel (%p159) target = $region32
    $region31: #{tpu_custom_call.1} parent=5 // pred_region
      %s163 = ssub.s32 %s9, 1
      %s164 = smul.u32 8, %s14
      %p165 = scmp.lt.s32.totalorder %s164, 15
      %s166 = scalar_select %p165, %s164, 15
      %s167 = smul.addr %s166, 8
      %s168 = scalar_lea.vmem %s0, %s167
      %p169 = pneg %p35
      %p170 = pneg %p32
      %s171 = smul.u32 8, %s14
      %p172 = scmp.lt.s32.totalorder %s171, 15
      %s173 = scalar_select %p172, %s171, 15
      %s174 = smul.addr %s173, 8
      %s175 = scalar_lea.vmem %s1, %s174
      %p176 = pneg %p61
      %p177 = pneg %p58
      %p178 = scmp.lt.s32.totalorder %s14, 1
      %s179 = scalar_select %p178, %s14, 1
      %s180 = smul.addr %s179, 8
      %s181 = scalar_lea.vmem %s2, %s180
      %p182 = pneg %p87
      %p183 = pneg %p84
      %p184 = pneg %p113
      %p185 = pneg %p110
      %s186 = smul.u32 8, %s14
      %p187 = scmp.lt.s32.totalorder %s186, 15
      %s188 = scalar_select %p187, %s186, 15
      %s189 = smul.addr %s188, 8
      %s190 = scalar_lea.vmem %s3, %s189
      %s191 = smul.u32 8, %s14
      %p192 = scmp.lt.s32.totalorder %s191, 15
      %s193 = scalar_select %p192, %s191, 15
      %s194 = smul.addr %s193, 8
      %s195 = scalar_lea.vmem %s0, %s194
      %s196 = smul.u32 8, %s14
      %s197 = smul.u32 8, %s14
      %p198 = scmp.lt.s32.totalorder %s197, 15
      %s199 = scalar_select %p198, %s197, 15
      %s200 = smul.addr %s199, 8
      %s201 = scalar_lea.vmem %s1, %s200
      %s202 = smul.u32 8, %s14
      %p203 = scmp.lt.s32.totalorder %s14, 1
      %s204 = scalar_select %p203, %s14, 1
      %s205 = smul.addr %s204, 8
      %s206 = scalar_lea.vmem %s2, %s205
      %s207 = smul.u32 8, %s14
      %p208 = scmp.lt.s32.totalorder %s207, 15
      %s209 = scalar_select %p208, %s207, 15
      %s210 = smul.addr %s209, 8
      %s211 = scalar_lea.vmem %s3, %s210
      %s212 = smul.u32 8, %s14
      %v213 = vld [vmem:[%s195] sm:$0xff]
      %v214 = vld [vmem:[%s195 + $0x8] sm:$0xff]
      %v215 = vld [vmem:[%s195 + $0x10] sm:$0xff]
      %v216 = vld [vmem:[%s195 + $0x18] sm:$0xff]
      %v217 = vld [vmem:[%s195 + $0x20] sm:$0xff]
      %v218 = vld [vmem:[%s195 + $0x28] sm:$0xff]
      %v219 = vld [vmem:[%s195 + $0x30] sm:$0xff]
      %v220 = vld [vmem:[%s195 + $0x38] sm:$0xff]
      %v221 = vld [vmem:[%s201] sm:$0xff]
      %v222 = vld [vmem:[%s201 + $0x8] sm:$0xff]
      %v223 = vld [vmem:[%s201 + $0x10] sm:$0xff]
      %v224 = vld [vmem:[%s201 + $0x18] sm:$0xff]
      %v225 = vld [vmem:[%s201 + $0x20] sm:$0xff]
      %v226 = vld [vmem:[%s201 + $0x28] sm:$0xff]
      %v227 = vld [vmem:[%s201 + $0x30] sm:$0xff]
      %v228 = vld [vmem:[%s201 + $0x38] sm:$0xff]
      %v229 = vld [vmem:[%s206] sm:$0xff]
      %v231 = vcombine.high %v229, %v229
      %v233 = vunpack.c.l.s4 1966171168
      %v234 = vunpack.c.0.s8 %v233
      %v235 = vlaneseq
      %v236 = vshrl.u32 %v235, 7
      %v237 = vsub.s32 %v234, %v236
      %v238 = vrot.slane %v229, %v237
      %v240 = vunpack.c.l.s4 1966171168
      %v241 = vunpack.c.0.s8 %v240
      %v242 = vlaneseq
      %v243 = vshrl.u32 %v242, 7
      %v244 = vsub.s32 %v241, %v243
      %v245 = vrot.slane %v231, %v244
      %v246 = vcombine.high %v238, %v238
      %v247 = vcombine.high %v245, %v245
      %v249 = vunpack.c.l.s4 1966171168
      %v250 = vunpack.c.0.s8 %v249
      %v251 = vlaneseq
      %v252 = vshrl.u32 %v251, 7
      %v253 = vsub.s32 %v250, %v252
      %v254 = vrot.slane %v238, %v253
      %v256 = vunpack.c.l.s4 1966171168
      %v257 = vunpack.c.0.s8 %v256
      %v258 = vlaneseq
      %v259 = vshrl.u32 %v258, 7
      %v260 = vsub.s32 %v257, %v259
      %v261 = vrot.slane %v245, %v260
      %v263 = vunpack.c.l.s4 1966171168
      %v264 = vunpack.c.0.s8 %v263
      %v265 = vlaneseq
      %v266 = vshrl.u32 %v265, 7
      %v267 = vsub.s32 %v264, %v266
      %v268 = vrot.slane %v246, %v267
      %v270 = vunpack.c.l.s4 1966171168
      %v271 = vunpack.c.0.s8 %v270
      %v272 = vlaneseq
      %v273 = vshrl.u32 %v272, 7
      %v274 = vsub.s32 %v271, %v273
      %v275 = vrot.slane %v247, %v274
      %v276 = vcombine.high %v254, %v254
      %v277 = vcombine.high %v261, %v261
      %v278 = vcombine.high %v268, %v268
      %v279 = vcombine.high %v275, %v275
      %v280 = vlaneseq
      %v281 = vshrl.u32 %v280, 7
      %v282 = vsub.s32 0, %v281
      %v283 = vrot.slane %v254, %v282
      %v284 = vlaneseq
      %v285 = vshrl.u32 %v284, 7
      %v286 = vsub.s32 0, %v285
      %v287 = vrot.slane %v268, %v286
      %v288 = vlaneseq
      %v289 = vshrl.u32 %v288, 7
      %v290 = vsub.s32 0, %v289
      %v291 = vrot.slane %v276, %v290
      %v292 = vlaneseq
      %v293 = vshrl.u32 %v292, 7
      %v294 = vsub.s32 0, %v293
      %v295 = vrot.slane %v278, %v294
      %v296 = vlaneseq
      %v297 = vshrl.u32 %v296, 7
      %v298 = vsub.s32 0, %v297
      %v299 = vrot.slane %v261, %v298
      %v300 = vlaneseq
      %v301 = vshrl.u32 %v300, 7
      %v302 = vsub.s32 0, %v301
      %v303 = vrot.slane %v275, %v302
      %v304 = vlaneseq
      %v305 = vshrl.u32 %v304, 7
      %v306 = vsub.s32 0, %v305
      %v307 = vrot.slane %v277, %v306
      %v308 = vlaneseq
      %v309 = vshrl.u32 %v308, 7
      %v310 = vsub.s32 0, %v309
      %v311 = vrot.slane %v279, %v310
      %vm320 = vcmask 64512
      %v322 = vsel %vm320, %v213, 0
      %324 = vmatprep.subr.mxu0 0.0
      %325 = vmatpush1.msra.mxu0 0.0
      %326 = vmatprep.subr.mxu0 0.0
      %327 = vmatpush1.msra.mxu0 0.0
      %328 = vmatprep.subr.mxu0 0.0
      %329 = vmatpush1.msra.mxu0 0.0
      %330 = vmatprep.subr.mxu0 0.0
      %331 = vmatpush1.msra.mxu0 0.0
      %332 = vmatprep.subr.mxu0 0.0
      %333 = vmatpush1.msra.mxu0 0.0
      %334 = vmatprep.subr.mxu0 0.0
      %335 = vmatpush1.msra.mxu0 0.0
      %336 = vmatprep.subr.mxu0 0.0
      %337 = vmatpush1.msra.mxu0 0.0
      %338 = vmatprep.subr.mxu0 0.0
      %339 = vmatpush1.msra.mxu0 0.0
      %340 = vmatprep.subr.mxu0 0.0
      %341 = vmatpush1.msra.mxu0 0.0
      %342 = vmatprep.subr.mxu0 0.0
      %343 = vmatpush1.msra.mxu0 0.0
      %344 = vmatprep.subr.mxu0 0.0
      %345 = vmatpush1.msra.mxu0 0.0
      %346 = vmatprep.subr.mxu0 0.0
      %347 = vmatpush1.msra.mxu0 0.0
      %348 = vmatprep.subr.mxu0 0.0
      %349 = vmatpush1.msra.mxu0 0.0
      %350 = vmatprep.subr.mxu0 0.0
      %351 = vmatpush1.msra.mxu0 0.0
      %352 = vmatprep.subr.mxu0 0.0
      %353 = vmatpush1.msra.mxu0 0.0
      %354 = vmatprep.subr.mxu0 0.0
      %355 = vmatpush1.msra.mxu0 %v221
      %356 = vmatprep.subr.mxu0 0.0
      %357 = vmatpush2.msra.mxu0 0.0
      %358 = vmatprep.subr.mxu0 0.0
      %359 = vmatpush2.msra.mxu0 0.0
      %360 = vmatprep.subr.mxu0 0.0
      %361 = vmatpush2.msra.mxu0 0.0
      %362 = vmatprep.subr.mxu0 0.0
      %363 = vmatpush2.msra.mxu0 0.0
      %364 = vmatprep.subr.mxu0 0.0
      %365 = vmatpush2.msra.mxu0 0.0
      %366 = vmatprep.subr.mxu0 0.0
      %367 = vmatpush2.msra.mxu0 0.0
      %368 = vmatprep.subr.mxu0 0.0
      %369 = vmatpush2.msra.mxu0 0.0
      %370 = vmatprep.subr.mxu0 0.0
      %371 = vmatpush2.msra.mxu0 0.0
      %372 = vmatprep.subr.mxu0 0.0
      %373 = vmatpush2.msra.mxu0 0.0
      %374 = vmatprep.subr.mxu0 0.0
      %375 = vmatpush2.msra.mxu0 0.0
      %376 = vmatprep.subr.mxu0 0.0
      %377 = vmatpush2.msra.mxu0 0.0
      %378 = vmatprep.subr.mxu0 0.0
      %379 = vmatpush2.msra.mxu0 0.0
      %380 = vmatprep.subr.mxu0 0.0
      %381 = vmatpush2.msra.mxu0 0.0
      %382 = vmatprep.subr.mxu0 0.0
      %383 = vmatpush2.msra.mxu0 0.0
      %384 = vmatprep.subr.mxu0 0.0
      %385 = vmatpush2.msra.mxu0 0.0
      %386 = vmatprep.subr.mxu0 0.0
      %387 = vmatpush2.msra.mxu0 0.0
      %388 = vmatprep.mubr.f32.mxu0 0.0
      %389 = vmatmul.mubr.f32.gmra.mxu0 %v322
      %v390 = vpop.f32.mrf.mxu0
      %v391 = vadd.f32 %v283, %v390
      %v392 = vpop.f32.mrf.mxu0
      %393 = vdwg.mxu0
      %v395 = vsel %vm320, %v214, 0
      %397 = vmatprep.subr.mxu0 0.0
      %398 = vmatpush1.msra.mxu0 0.0
      %399 = vmatprep.subr.mxu0 0.0
      %400 = vmatpush1.msra.mxu0 0.0
      %401 = vmatprep.subr.mxu0 0.0
      %402 = vmatpush1.msra.mxu0 0.0
      %403 = vmatprep.subr.mxu0 0.0
      %404 = vmatpush1.msra.mxu0 0.0
      %405 = vmatprep.subr.mxu0 0.0
      %406 = vmatpush1.msra.mxu0 0.0
      %407 = vmatprep.subr.mxu0 0.0
      %408 = vmatpush1.msra.mxu0 0.0
      %409 = vmatprep.subr.mxu0 0.0
      %410 = vmatpush1.msra.mxu0 0.0
      %411 = vmatprep.subr.mxu0 0.0
      %412 = vmatpush1.msra.mxu0 0.0
      %413 = vmatprep.subr.mxu0 0.0
      %414 = vmatpush1.msra.mxu0 0.0
      %415 = vmatprep.subr.mxu0 0.0
      %416 = vmatpush1.msra.mxu0 0.0
      %417 = vmatprep.subr.mxu0 0.0
      %418 = vmatpush1.msra.mxu0 0.0
      %419 = vmatprep.subr.mxu0 0.0
      %420 = vmatpush1.msra.mxu0 0.0
      %421 = vmatprep.subr.mxu0 0.0
      %422 = vmatpush1.msra.mxu0 0.0
      %423 = vmatprep.subr.mxu0 0.0
      %424 = vmatpush1.msra.mxu0 0.0
      %425 = vmatprep.subr.mxu0 0.0
      %426 = vmatpush1.msra.mxu0 0.0
      %427 = vmatprep.subr.mxu0 0.0
      %428 = vmatpush1.msra.mxu0 %v222
      %429 = vmatprep.subr.mxu0 0.0
      %430 = vmatpush2.msra.mxu0 0.0
      %431 = vmatprep.subr.mxu0 0.0
      %432 = vmatpush2.msra.mxu0 0.0
      %433 = vmatprep.subr.mxu0 0.0
      %434 = vmatpush2.msra.mxu0 0.0
      %435 = vmatprep.subr.mxu0 0.0
      %436 = vmatpush2.msra.mxu0 0.0
      %437 = vmatprep.subr.mxu0 0.0
      %438 = vmatpush2.msra.mxu0 0.0
      %439 = vmatprep.subr.mxu0 0.0
      %440 = vmatpush2.msra.mxu0 0.0
      %441 = vmatprep.subr.mxu0 0.0
      %442 = vmatpush2.msra.mxu0 0.0
      %443 = vmatprep.subr.mxu0 0.0
      %444 = vmatpush2.msra.mxu0 0.0
      %445 = vmatprep.subr.mxu0 0.0
      %446 = vmatpush2.msra.mxu0 0.0
      %447 = vmatprep.subr.mxu0 0.0
      %448 = vmatpush2.msra.mxu0 0.0
      %449 = vmatprep.subr.mxu0 0.0
      %450 = vmatpush2.msra.mxu0 0.0
      %451 = vmatprep.subr.mxu0 0.0
      %452 = vmatpush2.msra.mxu0 0.0
      %453 = vmatprep.subr.mxu0 0.0
      %454 = vmatpush2.msra.mxu0 0.0
      %455 = vmatprep.subr.mxu0 0.0
      %456 = vmatpush2.msra.mxu0 0.0
      %457 = vmatprep.subr.mxu0 0.0
      %458 = vmatpush2.msra.mxu0 0.0
      %459 = vmatprep.subr.mxu0 0.0
      %460 = vmatpush2.msra.mxu0 0.0
      %461 = vmatprep.mubr.f32.mxu0 0.0
      %462 = vmatmul.mubr.f32.gmra.mxu0 %v395
      %v463 = vpop.f32.mrf.mxu0
      %v464 = vadd.f32 %v287, %v463
      %v465 = vpop.f32.mrf.mxu0
      %466 = vdwg.mxu0
      %v468 = vsel %vm320, %v215, 0
      %470 = vmatprep.subr.mxu0 0.0
      %471 = vmatpush1.msra.mxu0 0.0
      %472 = vmatprep.subr.mxu0 0.0
      %473 = vmatpush1.msra.mxu0 0.0
      %474 = vmatprep.subr.mxu0 0.0
      %475 = vmatpush1.msra.mxu0 0.0
      %476 = vmatprep.subr.mxu0 0.0
      %477 = vmatpush1.msra.mxu0 0.0
      %478 = vmatprep.subr.mxu0 0.0
      %479 = vmatpush1.msra.mxu0 0.0
      %480 = vmatprep.subr.mxu0 0.0
      %481 = vmatpush1.msra.mxu0 0.0
      %482 = vmatprep.subr.mxu0 0.0
      %483 = vmatpush1.msra.mxu0 0.0
      %484 = vmatprep.subr.mxu0 0.0
      %485 = vmatpush1.msra.mxu0 0.0
      %486 = vmatprep.subr.mxu0 0.0
      %487 = vmatpush1.msra.mxu0 0.0
      %488 = vmatprep.subr.mxu0 0.0
      %489 = vmatpush1.msra.mxu0 0.0
      %490 = vmatprep.subr.mxu0 0.0
      %491 = vmatpush1.msra.mxu0 0.0
      %492 = vmatprep.subr.mxu0 0.0
      %493 = vmatpush1.msra.mxu0 0.0
      %494 = vmatprep.subr.mxu0 0.0
      %495 = vmatpush1.msra.mxu0 0.0
      %496 = vmatprep.subr.mxu0 0.0
      %497 = vmatpush1.msra.mxu0 0.0
      %498 = vmatprep.subr.mxu0 0.0
      %499 = vmatpush1.msra.mxu0 0.0
      %500 = vmatprep.subr.mxu0 0.0
      %501 = vmatpush1.msra.mxu0 %v223
      %502 = vmatprep.subr.mxu0 0.0
      %503 = vmatpush2.msra.mxu0 0.0
      %504 = vmatprep.subr.mxu0 0.0
      %505 = vmatpush2.msra.mxu0 0.0
      %506 = vmatprep.subr.mxu0 0.0
      %507 = vmatpush2.msra.mxu0 0.0
      %508 = vmatprep.subr.mxu0 0.0
      %509 = vmatpush2.msra.mxu0 0.0
      %510 = vmatprep.subr.mxu0 0.0
      %511 = vmatpush2.msra.mxu0 0.0
      %512 = vmatprep.subr.mxu0 0.0
      %513 = vmatpush2.msra.mxu0 0.0
      %514 = vmatprep.subr.mxu0 0.0
      %515 = vmatpush2.msra.mxu0 0.0
      %516 = vmatprep.subr.mxu0 0.0
      %517 = vmatpush2.msra.mxu0 0.0
      %518 = vmatprep.subr.mxu0 0.0
      %519 = vmatpush2.msra.mxu0 0.0
      %520 = vmatprep.subr.mxu0 0.0
      %521 = vmatpush2.msra.mxu0 0.0
      %522 = vmatprep.subr.mxu0 0.0
      %523 = vmatpush2.msra.mxu0 0.0
      %524 = vmatprep.subr.mxu0 0.0
      %525 = vmatpush2.msra.mxu0 0.0
      %526 = vmatprep.subr.mxu0 0.0
      %527 = vmatpush2.msra.mxu0 0.0
      %528 = vmatprep.subr.mxu0 0.0
      %529 = vmatpush2.msra.mxu0 0.0
      %530 = vmatprep.subr.mxu0 0.0
      %531 = vmatpush2.msra.mxu0 0.0
      %532 = vmatprep.subr.mxu0 0.0
      %533 = vmatpush2.msra.mxu0 0.0
      %534 = vmatprep.mubr.f32.mxu0 0.0
      %535 = vmatmul.mubr.f32.gmra.mxu0 %v468
      %v536 = vpop.f32.mrf.mxu0
      %v537 = vadd.f32 %v291, %v536
      %v538 = vpop.f32.mrf.mxu0
      %539 = vdwg.mxu0
      %v541 = vsel %vm320, %v216, 0
      %543 = vmatprep.subr.mxu0 0.0
      %544 = vmatpush1.msra.mxu0 0.0
      %545 = vmatprep.subr.mxu0 0.0
      %546 = vmatpush1.msra.mxu0 0.0
      %547 = vmatprep.subr.mxu0 0.0
      %548 = vmatpush1.msra.mxu0 0.0
      %549 = vmatprep.subr.mxu0 0.0
      %550 = vmatpush1.msra.mxu0 0.0
      %551 = vmatprep.subr.mxu0 0.0
      %552 = vmatpush1.msra.mxu0 0.0
      %553 = vmatprep.subr.mxu0 0.0
      %554 = vmatpush1.msra.mxu0 0.0
      %555 = vmatprep.subr.mxu0 0.0
      %556 = vmatpush1.msra.mxu0 0.0
      %557 = vmatprep.subr.mxu0 0.0
      %558 = vmatpush1.msra.mxu0 0.0
      %559 = vmatprep.subr.mxu0 0.0
      %560 = vmatpush1.msra.mxu0 0.0
      %561 = vmatprep.subr.mxu0 0.0
      %562 = vmatpush1.msra.mxu0 0.0
      %563 = vmatprep.subr.mxu0 0.0
      %564 = vmatpush1.msra.mxu0 0.0
      %565 = vmatprep.subr.mxu0 0.0
      %566 = vmatpush1.msra.mxu0 0.0
      %567 = vmatprep.subr.mxu0 0.0
      %568 = vmatpush1.msra.mxu0 0.0
      %569 = vmatprep.subr.mxu0 0.0
      %570 = vmatpush1.msra.mxu0 0.0
      %571 = vmatprep.subr.mxu0 0.0
      %572 = vmatpush1.msra.mxu0 0.0
      %573 = vmatprep.subr.mxu0 0.0
      %574 = vmatpush1.msra.mxu0 %v224
      %575 = vmatprep.subr.mxu0 0.0
      %576 = vmatpush2.msra.mxu0 0.0
      %577 = vmatprep.subr.mxu0 0.0
      %578 = vmatpush2.msra.mxu0 0.0
      %579 = vmatprep.subr.mxu0 0.0
      %580 = vmatpush2.msra.mxu0 0.0
      %581 = vmatprep.subr.mxu0 0.0
      %582 = vmatpush2.msra.mxu0 0.0
      %583 = vmatprep.subr.mxu0 0.0
      %584 = vmatpush2.msra.mxu0 0.0
      %585 = vmatprep.subr.mxu0 0.0
      %586 = vmatpush2.msra.mxu0 0.0
      %587 = vmatprep.subr.mxu0 0.0
      %588 = vmatpush2.msra.mxu0 0.0
      %589 = vmatprep.subr.mxu0 0.0
      %590 = vmatpush2.msra.mxu0 0.0
      %591 = vmatprep.subr.mxu0 0.0
      %592 = vmatpush2.msra.mxu0 0.0
      %593 = vmatprep.subr.mxu0 0.0
      %594 = vmatpush2.msra.mxu0 0.0
      %595 = vmatprep.subr.mxu0 0.0
      %596 = vmatpush2.msra.mxu0 0.0
      %597 = vmatprep.subr.mxu0 0.0
      %598 = vmatpush2.msra.mxu0 0.0
      %599 = vmatprep.subr.mxu0 0.0
      %600 = vmatpush2.msra.mxu0 0.0
      %601 = vmatprep.subr.mxu0 0.0
      %602 = vmatpush2.msra.mxu0 0.0
      %603 = vmatprep.subr.mxu0 0.0
      %604 = vmatpush2.msra.mxu0 0.0
      %605 = vmatprep.subr.mxu0 0.0
      %606 = vmatpush2.msra.mxu0 0.0
      %607 = vmatprep.mubr.f32.mxu0 0.0
      %608 = vmatmul.mubr.f32.gmra.mxu0 %v541
      %v609 = vpop.f32.mrf.mxu0
      %v610 = vadd.f32 %v295, %v609
      %v611 = vpop.f32.mrf.mxu0
      %612 = vdwg.mxu0
      %v614 = vsel %vm320, %v217, 0
      %616 = vmatprep.subr.mxu0 0.0
      %617 = vmatpush1.msra.mxu0 0.0
      %618 = vmatprep.subr.mxu0 0.0
      %619 = vmatpush1.msra.mxu0 0.0
      %620 = vmatprep.subr.mxu0 0.0
      %621 = vmatpush1.msra.mxu0 0.0
      %622 = vmatprep.subr.mxu0 0.0
      %623 = vmatpush1.msra.mxu0 0.0
      %624 = vmatprep.subr.mxu0 0.0
      %625 = vmatpush1.msra.mxu0 0.0
      %626 = vmatprep.subr.mxu0 0.0
      %627 = vmatpush1.msra.mxu0 0.0
      %628 = vmatprep.subr.mxu0 0.0
      %629 = vmatpush1.msra.mxu0 0.0
      %630 = vmatprep.subr.mxu0 0.0
      %631 = vmatpush1.msra.mxu0 0.0
      %632 = vmatprep.subr.mxu0 0.0
      %633 = vmatpush1.msra.mxu0 0.0
      %634 = vmatprep.subr.mxu0 0.0
      %635 = vmatpush1.msra.mxu0 0.0
      %636 = vmatprep.subr.mxu0 0.0
      %637 = vmatpush1.msra.mxu0 0.0
      %638 = vmatprep.subr.mxu0 0.0
      %639 = vmatpush1.msra.mxu0 0.0
      %640 = vmatprep.subr.mxu0 0.0
      %641 = vmatpush1.msra.mxu0 0.0
      %642 = vmatprep.subr.mxu0 0.0
      %643 = vmatpush1.msra.mxu0 0.0
      %644 = vmatprep.subr.mxu0 0.0
      %645 = vmatpush1.msra.mxu0 0.0
      %646 = vmatprep.subr.mxu0 0.0
      %647 = vmatpush1.msra.mxu0 %v225
      %648 = vmatprep.subr.mxu0 0.0
      %649 = vmatpush2.msra.mxu0 0.0
      %650 = vmatprep.subr.mxu0 0.0
      %651 = vmatpush2.msra.mxu0 0.0
      %652 = vmatprep.subr.mxu0 0.0
      %653 = vmatpush2.msra.mxu0 0.0
      %654 = vmatprep.subr.mxu0 0.0
      %655 = vmatpush2.msra.mxu0 0.0
      %656 = vmatprep.subr.mxu0 0.0
      %657 = vmatpush2.msra.mxu0 0.0
      %658 = vmatprep.subr.mxu0 0.0
      %659 = vmatpush2.msra.mxu0 0.0
      %660 = vmatprep.subr.mxu0 0.0
      %661 = vmatpush2.msra.mxu0 0.0
      %662 = vmatprep.subr.mxu0 0.0
      %663 = vmatpush2.msra.mxu0 0.0
      %664 = vmatprep.subr.mxu0 0.0
      %665 = vmatpush2.msra.mxu0 0.0
      %666 = vmatprep.subr.mxu0 0.0
      %667 = vmatpush2.msra.mxu0 0.0
      %668 = vmatprep.subr.mxu0 0.0
      %669 = vmatpush2.msra.mxu0 0.0
      %670 = vmatprep.subr.mxu0 0.0
      %671 = vmatpush2.msra.mxu0 0.0
      %672 = vmatprep.subr.mxu0 0.0
      %673 = vmatpush2.msra.mxu0 0.0
      %674 = vmatprep.subr.mxu0 0.0
      %675 = vmatpush2.msra.mxu0 0.0
      %676 = vmatprep.subr.mxu0 0.0
      %677 = vmatpush2.msra.mxu0 0.0
      %678 = vmatprep.subr.mxu0 0.0
      %679 = vmatpush2.msra.mxu0 0.0
      %680 = vmatprep.mubr.f32.mxu0 0.0
      %681 = vmatmul.mubr.f32.gmra.mxu0 %v614
      %v682 = vpop.f32.mrf.mxu0
      %v683 = vadd.f32 %v299, %v682
      %v684 = vpop.f32.mrf.mxu0
      %685 = vdwg.mxu0
      %v687 = vsel %vm320, %v218, 0
      %689 = vmatprep.subr.mxu0 0.0
      %690 = vmatpush1.msra.mxu0 0.0
      %691 = vmatprep.subr.mxu0 0.0
      %692 = vmatpush1.msra.mxu0 0.0
      %693 = vmatprep.subr.mxu0 0.0
      %694 = vmatpush1.msra.mxu0 0.0
      %695 = vmatprep.subr.mxu0 0.0
      %696 = vmatpush1.msra.mxu0 0.0
      %697 = vmatprep.subr.mxu0 0.0
      %698 = vmatpush1.msra.mxu0 0.0
      %699 = vmatprep.subr.mxu0 0.0
      %700 = vmatpush1.msra.mxu0 0.0
      %701 = vmatprep.subr.mxu0 0.0
      %702 = vmatpush1.msra.mxu0 0.0
      %703 = vmatprep.subr.mxu0 0.0
      %704 = vmatpush1.msra.mxu0 0.0
      %705 = vmatprep.subr.mxu0 0.0
      %706 = vmatpush1.msra.mxu0 0.0
      %707 = vmatprep.subr.mxu0 0.0
      %708 = vmatpush1.msra.mxu0 0.0
      %709 = vmatprep.subr.mxu0 0.0
      %710 = vmatpush1.msra.mxu0 0.0
      %711 = vmatprep.subr.mxu0 0.0
      %712 = vmatpush1.msra.mxu0 0.0
      %713 = vmatprep.subr.mxu0 0.0
      %714 = vmatpush1.msra.mxu0 0.0
      %715 = vmatprep.subr.mxu0 0.0
      %716 = vmatpush1.msra.mxu0 0.0
      %717 = vmatprep.subr.mxu0 0.0
      %718 = vmatpush1.msra.mxu0 0.0
      %719 = vmatprep.subr.mxu0 0.0
      %720 = vmatpush1.msra.mxu0 %v226
      %721 = vmatprep.subr.mxu0 0.0
      %722 = vmatpush2.msra.mxu0 0.0
      %723 = vmatprep.subr.mxu0 0.0
      %724 = vmatpush2.msra.mxu0 0.0
      %725 = vmatprep.subr.mxu0 0.0
      %726 = vmatpush2.msra.mxu0 0.0
      %727 = vmatprep.subr.mxu0 0.0
      %728 = vmatpush2.msra.mxu0 0.0
      %729 = vmatprep.subr.mxu0 0.0
      %730 = vmatpush2.msra.mxu0 0.0
      %731 = vmatprep.subr.mxu0 0.0
      %732 = vmatpush2.msra.mxu0 0.0
      %733 = vmatprep.subr.mxu0 0.0
      %734 = vmatpush2.msra.mxu0 0.0
      %735 = vmatprep.subr.mxu0 0.0
      %736 = vmatpush2.msra.mxu0 0.0
      %737 = vmatprep.subr.mxu0 0.0
      %738 = vmatpush2.msra.mxu0 0.0
      %739 = vmatprep.subr.mxu0 0.0
      %740 = vmatpush2.msra.mxu0 0.0
      %741 = vmatprep.subr.mxu0 0.0
      %742 = vmatpush2.msra.mxu0 0.0
      %743 = vmatprep.subr.mxu0 0.0
      %744 = vmatpush2.msra.mxu0 0.0
      %745 = vmatprep.subr.mxu0 0.0
      %746 = vmatpush2.msra.mxu0 0.0
      %747 = vmatprep.subr.mxu0 0.0
      %748 = vmatpush2.msra.mxu0 0.0
      %749 = vmatprep.subr.mxu0 0.0
      %750 = vmatpush2.msra.mxu0 0.0
      %751 = vmatprep.subr.mxu0 0.0
      %752 = vmatpush2.msra.mxu0 0.0
      %753 = vmatprep.mubr.f32.mxu0 0.0
      %754 = vmatmul.mubr.f32.gmra.mxu0 %v687
      %v755 = vpop.f32.mrf.mxu0
      %v756 = vadd.f32 %v303, %v755
      %v757 = vpop.f32.mrf.mxu0
      %758 = vdwg.mxu0
      %v760 = vsel %vm320, %v219, 0
      %762 = vmatprep.subr.mxu0 0.0
      %763 = vmatpush1.msra.mxu0 0.0
      %764 = vmatprep.subr.mxu0 0.0
      %765 = vmatpush1.msra.mxu0 0.0
      %766 = vmatprep.subr.mxu0 0.0
      %767 = vmatpush1.msra.mxu0 0.0
      %768 = vmatprep.subr.mxu0 0.0
      %769 = vmatpush1.msra.mxu0 0.0
      %770 = vmatprep.subr.mxu0 0.0
      %771 = vmatpush1.msra.mxu0 0.0
      %772 = vmatprep.subr.mxu0 0.0
      %773 = vmatpush1.msra.mxu0 0.0
      %774 = vmatprep.subr.mxu0 0.0
      %775 = vmatpush1.msra.mxu0 0.0
      %776 = vmatprep.subr.mxu0 0.0
      %777 = vmatpush1.msra.mxu0 0.0
      %778 = vmatprep.subr.mxu0 0.0
      %779 = vmatpush1.msra.mxu0 0.0
      %780 = vmatprep.subr.mxu0 0.0
      %781 = vmatpush1.msra.mxu0 0.0
      %782 = vmatprep.subr.mxu0 0.0
      %783 = vmatpush1.msra.mxu0 0.0
      %784 = vmatprep.subr.mxu0 0.0
      %785 = vmatpush1.msra.mxu0 0.0
      %786 = vmatprep.subr.mxu0 0.0
      %787 = vmatpush1.msra.mxu0 0.0
      %788 = vmatprep.subr.mxu0 0.0
      %789 = vmatpush1.msra.mxu0 0.0
      %790 = vmatprep.subr.mxu0 0.0
      %791 = vmatpush1.msra.mxu0 0.0
      %792 = vmatprep.subr.mxu0 0.0
      %793 = vmatpush1.msra.mxu0 %v227
      %794 = vmatprep.subr.mxu0 0.0
      %795 = vmatpush2.msra.mxu0 0.0
      %796 = vmatprep.subr.mxu0 0.0
      %797 = vmatpush2.msra.mxu0 0.0
      %798 = vmatprep.subr.mxu0 0.0
      %799 = vmatpush2.msra.mxu0 0.0
      %800 = vmatprep.subr.mxu0 0.0
      %801 = vmatpush2.msra.mxu0 0.0
      %802 = vmatprep.subr.mxu0 0.0
      %803 = vmatpush2.msra.mxu0 0.0
      %804 = vmatprep.subr.mxu0 0.0
      %805 = vmatpush2.msra.mxu0 0.0
      %806 = vmatprep.subr.mxu0 0.0
      %807 = vmatpush2.msra.mxu0 0.0
      %808 = vmatprep.subr.mxu0 0.0
      %809 = vmatpush2.msra.mxu0 0.0
      %810 = vmatprep.subr.mxu0 0.0
      %811 = vmatpush2.msra.mxu0 0.0
      %812 = vmatprep.subr.mxu0 0.0
      %813 = vmatpush2.msra.mxu0 0.0
      %814 = vmatprep.subr.mxu0 0.0
      %815 = vmatpush2.msra.mxu0 0.0
      %816 = vmatprep.subr.mxu0 0.0
      %817 = vmatpush2.msra.mxu0 0.0
      %818 = vmatprep.subr.mxu0 0.0
      %819 = vmatpush2.msra.mxu0 0.0
      %820 = vmatprep.subr.mxu0 0.0
      %821 = vmatpush2.msra.mxu0 0.0
      %822 = vmatprep.subr.mxu0 0.0
      %823 = vmatpush2.msra.mxu0 0.0
      %824 = vmatprep.subr.mxu0 0.0
      %825 = vmatpush2.msra.mxu0 0.0
      %826 = vmatprep.mubr.f32.mxu0 0.0
      %827 = vmatmul.mubr.f32.gmra.mxu0 %v760
      %v828 = vpop.f32.mrf.mxu0
      %v829 = vadd.f32 %v307, %v828
      %v830 = vpop.f32.mrf.mxu0
      %831 = vdwg.mxu0
      %v833 = vsel %vm320, %v220, 0
      %835 = vmatprep.subr.mxu0 0.0
      %836 = vmatpush1.msra.mxu0 0.0
      %837 = vmatprep.subr.mxu0 0.0
      %838 = vmatpush1.msra.mxu0 0.0
      %839 = vmatprep.subr.mxu0 0.0
      %840 = vmatpush1.msra.mxu0 0.0
      %841 = vmatprep.subr.mxu0 0.0
      %842 = vmatpush1.msra.mxu0 0.0
      %843 = vmatprep.subr.mxu0 0.0
      %844 = vmatpush1.msra.mxu0 0.0
      %845 = vmatprep.subr.mxu0 0.0
      %846 = vmatpush1.msra.mxu0 0.0
      %847 = vmatprep.subr.mxu0 0.0
      %848 = vmatpush1.msra.mxu0 0.0
      %849 = vmatprep.subr.mxu0 0.0
      %850 = vmatpush1.msra.mxu0 0.0
      %851 = vmatprep.subr.mxu0 0.0
      %852 = vmatpush1.msra.mxu0 0.0
      %853 = vmatprep.subr.mxu0 0.0
      %854 = vmatpush1.msra.mxu0 0.0
      %855 = vmatprep.subr.mxu0 0.0
      %856 = vmatpush1.msra.mxu0 0.0
      %857 = vmatprep.subr.mxu0 0.0
      %858 = vmatpush1.msra.mxu0 0.0
      %859 = vmatprep.subr.mxu0 0.0
      %860 = vmatpush1.msra.mxu0 0.0
      %861 = vmatprep.subr.mxu0 0.0
      %862 = vmatpush1.msra.mxu0 0.0
      %863 = vmatprep.subr.mxu0 0.0
      %864 = vmatpush1.msra.mxu0 0.0
      %865 = vmatprep.subr.mxu0 0.0
      %866 = vmatpush1.msra.mxu0 %v228
      %867 = vmatprep.subr.mxu0 0.0
      %868 = vmatpush2.msra.mxu0 0.0
      %869 = vmatprep.subr.mxu0 0.0
      %870 = vmatpush2.msra.mxu0 0.0
      %871 = vmatprep.subr.mxu0 0.0
      %872 = vmatpush2.msra.mxu0 0.0
      %873 = vmatprep.subr.mxu0 0.0
      %874 = vmatpush2.msra.mxu0 0.0
      %875 = vmatprep.subr.mxu0 0.0
      %876 = vmatpush2.msra.mxu0 0.0
      %877 = vmatprep.subr.mxu0 0.0
      %878 = vmatpush2.msra.mxu0 0.0
      %879 = vmatprep.subr.mxu0 0.0
      %880 = vmatpush2.msra.mxu0 0.0
      %881 = vmatprep.subr.mxu0 0.0
      %882 = vmatpush2.msra.mxu0 0.0
      %883 = vmatprep.subr.mxu0 0.0
      %884 = vmatpush2.msra.mxu0 0.0
      %885 = vmatprep.subr.mxu0 0.0
      %886 = vmatpush2.msra.mxu0 0.0
      %887 = vmatprep.subr.mxu0 0.0
      %888 = vmatpush2.msra.mxu0 0.0
      %889 = vmatprep.subr.mxu0 0.0
      %890 = vmatpush2.msra.mxu0 0.0
      %891 = vmatprep.subr.mxu0 0.0
      %892 = vmatpush2.msra.mxu0 0.0
      %893 = vmatprep.subr.mxu0 0.0
      %894 = vmatpush2.msra.mxu0 0.0
      %895 = vmatprep.subr.mxu0 0.0
      %896 = vmatpush2.msra.mxu0 0.0
      %897 = vmatprep.subr.mxu0 0.0
      %898 = vmatpush2.msra.mxu0 0.0
      %899 = vmatprep.mubr.f32.mxu0 0.0
      %900 = vmatmul.mubr.f32.gmra.mxu0 %v833
      %v901 = vpop.f32.mrf.mxu0
      %v902 = vadd.f32 %v311, %v901
      %v903 = vpop.f32.mrf.mxu0
      %904 = vdwg.mxu0
      %905 = vst.msk [vmem:[%s211] sm:$0xff] %vm320, %v391
      %906 = vst.msk [vmem:[%s211 + $0x8] sm:$0xff] %vm320, %v464
      %907 = vst.msk [vmem:[%s211 + $0x10] sm:$0xff] %vm320, %v537
      %908 = vst.msk [vmem:[%s211 + $0x18] sm:$0xff] %vm320, %v610
      %909 = vst.msk [vmem:[%s211 + $0x20] sm:$0xff] %vm320, %v683
      %910 = vst.msk [vmem:[%s211 + $0x28] sm:$0xff] %vm320, %v756
      %911 = vst.msk [vmem:[%s211 + $0x30] sm:$0xff] %vm320, %v829
      %912 = vst.msk [vmem:[%s211 + $0x38] sm:$0xff] %vm320, %v902
      %s913 = smul.u32 8, %s14
      %p914 = scmp.lt.s32.totalorder %s913, 15
      %s915 = scalar_select %p914, %s913, 15
      %s916 = smul.addr %s915, 8
      %s917 = scalar_lea.vmem %s3, %s916
      // Predicated region
      $region33: #{tpu_custom_call.1} parent=31 // pred_check
        %p918 = pneg %p110
      $region34: #{tpu_custom_call.1} parent=31 // pred_check_branch
        %920 = sbr.rel (%p918) target = $region36
      $region35: #{tpu_custom_call.1} parent=31 // pred_region
        %s921 = smul.u32 8, %s14
      $region36: #{tpu_custom_call.1} parent=31 // pred_fallthru
        _
    $region32: #{tpu_custom_call.1} parent=5 // pred_fallthru
      _
    %p922 = scmp.le.s32.totalorder 2, %s9
    // Predicated region
    $region37: #{tpu_custom_call.1} parent=5 // pred_check
      %p923 = pneg %p922
    $region38: #{tpu_custom_call.1} parent=5 // pred_check_branch
      %925 = sbr.rel (%p923) target = $region40
    $region39: #{tpu_custom_call.1} parent=5 // pred_region
      %s926 = ssub.s32 %s9, 2
      // Predicated region
      $region41: #{tpu_custom_call.1} parent=39 // pred_check
        %p927 = pneg %p116
      $region42: #{tpu_custom_call.1} parent=39 // pred_check_branch
        %929 = sbr.rel (%p927) target = $region44
      $region43: #{tpu_custom_call.1} parent=39 // pred_region
        %s930 = smul.u32 8, %s15
        %p931 = scmp.lt.s32.totalorder %s930, 15
        %s932 = scalar_select %p931, %s930, 15
        %s933 = smul.addr %s932, 8
        %s934 = scalar_lea.vmem %s3, %s933
      $region44: #{tpu_custom_call.1} parent=39 // pred_fallthru
        _
    $region40: #{tpu_custom_call.1} parent=5 // pred_fallthru
      _
  $region6: #{tpu_custom_call.1} parent=0 // loop_footer
    %s13 = sadd.s32 1, %s9
  $region7: #{tpu_custom_call.1} parent=0 // loop_footer_branch
    %8 = sbr.rel target = $region3
  $region8: #{tpu_custom_call.1} parent=0 // loop_exit
    _

</llo_original>
